<compile_context>
chip_gen: v7x
topology: tpu7x:2x2x1
jax: 0.10.0
libtpu: 0.0.40
codegen_flags: <defaults>
</compile_context>

<pallas_src>
import functools

import jax
import jax.numpy as jnp
from jax.experimental import pallas as pl
from jax.experimental.pallas import tpu as pltpu

KH, KW = 4, 4            # fixed kernel_size=(4,4) from the module
NEG_SLOPE = 0.2          # LeakyReLU(0.2)
BN_EPS = 1e-5            # nn.BatchNorm2d default eps


def _round_up(v, m):
    return (v + m - 1) // m * m


def _conv_stats_kernel(w_ref, x_ref, conv_ref, mean_ref, invstd_ref, *, true_m):
    """Pass 1: folded conv matmul + per-channel batch statistics.

    w_ref:      (Cout, K)  bf16   K = KH*KW*Cin (taps folded into contraction)
    x_ref:      (K, tm)    bf16   one M-tile of the channel-major im2col slab
    conv_ref:   (Cout, tm) f32    conv output tile (lane dense on M)
    mean_ref:   (Cout, 1)  f32    running sum   -> finalized to batch mean
    invstd_ref: (Cout, 1)  f32    running sumsq -> finalized to 1/sqrt(var+eps)
    """
    i = pl.program_id(0)
    nm = pl.num_programs(0)

    @pl.when(i == 0)
    def _init():
        mean_ref[...] = jnp.zeros_like(mean_ref)
        invstd_ref[...] = jnp.zeros_like(invstd_ref)

    # Single MXU matmul per tile: (Cout, K) @ (K, tm) -> (Cout, tm), f32 acc.
    acc = jnp.dot(w_ref[...], x_ref[...], preferred_element_type=jnp.float32)
    conv_ref[...] = acc

    # Padded (zero) columns contribute nothing; the wrapper divides by true M.
    mean_ref[...] += jnp.sum(acc, axis=1, keepdims=True)
    invstd_ref[...] += jnp.sum(acc * acc, axis=1, keepdims=True)

    @pl.when(i == nm - 1)
    def _finalize():
        inv_m = 1.0 / float(true_m)
        mu = mean_ref[...] * inv_m
        var = jnp.maximum(invstd_ref[...] * inv_m - mu * mu, 0.0)
        mean_ref[...] = mu
        invstd_ref[...] = jax.lax.rsqrt(var + BN_EPS)


def _bn_lrelu_kernel(conv_ref, mean_ref, invstd_ref, out_ref):
    """Pass 2: normalize with the finalized batch stats + LeakyReLU(0.2)."""
    y = (conv_ref[...] - mean_ref[...]) * invstd_ref[...]
    out_ref[...] = jnp.where(y >= 0, y, NEG_SLOPE * y)


@functools.partial(jax.jit, static_argnames=("dilation", "block_m"))
def dilated_conv_block(x_nchw, weight_oihw, bias, *, dilation, block_m=512):
    """Forward pass of DilatedConvBlock.

    x_nchw:      (N, Cin, H, W)      float32
    weight_oihw: (Cout, Cin, 4, 4)   float32 (PyTorch Conv2d layout)
    bias:        (Cout,)             float32 (unused: no-op under affine=False BN)
    returns:     (N, Cout, Ho, Wo)   float32, Ho = H + 2 - 3*dilation
    """
    N, Cin, H, W = x_nchw.shape
    Cout = weight_oihw.shape[0]
    d = dilation
    Ho = H + 2 - d * (KH - 1)
    Wo = W + 2 - d * (KW - 1)
    M = N * Ho * Wo
    K = KH * KW * Cin

    # Conv bias is a mathematical no-op under training-mode BatchNorm2d
    # (affine=False): the batch mean absorbs it, variance is shift-invariant.
    del bias

    # ---- glue: pad + build the K-folded, channel-major im2col slab (K, M) ----
    # TODO(synk): replace the HBM im2col with halo-tiled BlockSpecs / manual DMA
    # over the padded NHWC input to avoid the 16x duplicated slab in HBM.
    x_nhwc = jnp.transpose(x_nchw, (0, 2, 3, 1))
    x_pad = jnp.pad(x_nhwc, ((0, 0), (1, 1), (1, 1), (0, 0)))
    x_pad_c = jnp.transpose(x_pad, (3, 0, 1, 2))                  # (Cin, N, Hp, Wp)
    taps = [x_pad_c[:, :, kh * d:kh * d + Ho, kw * d:kw * d + Wo].reshape(Cin, M)
            for kh in range(KH) for kw in range(KW)]
    x_t = jnp.concatenate(taps, axis=0).astype(jnp.bfloat16)      # (K, M)

    # (Cout, Cin, KH, KW) -> (Cout, KH, KW, Cin) -> (Cout, K)  [same tap order]
    w_t = jnp.transpose(weight_oihw, (0, 2, 3, 1)).reshape(Cout, K)
    w_t = w_t.astype(jnp.bfloat16)

    # ---- M tiling: pad with zero columns; stats divide by the true M ----
    tm = min(block_m, _round_up(M, 8))     # single full-extent tile if M is small
    m_pad = _round_up(M, tm)
    if m_pad != M:
        x_t = jnp.pad(x_t, ((0, 0), (0, m_pad - M)))
    nm = m_pad // tm

    # ---- pass 1: conv + batch statistics (accumulator over the M grid axis) ----
    conv_t, mean, invstd = pl.pallas_call(
        functools.partial(_conv_stats_kernel, true_m=M),
        out_shape=(
            jax.ShapeDtypeStruct((Cout, m_pad), jnp.float32),
            jax.ShapeDtypeStruct((Cout, 1), jnp.float32),
            jax.ShapeDtypeStruct((Cout, 1), jnp.float32),
        ),
        grid=(nm,),
        in_specs=[
            pl.BlockSpec((Cout, K), lambda i: (0, 0)),
            pl.BlockSpec((K, tm), lambda i: (0, i)),
        ],
        out_specs=(
            pl.BlockSpec((Cout, tm), lambda i: (0, i)),
            pl.BlockSpec((Cout, 1), lambda i: (0, 0)),
            pl.BlockSpec((Cout, 1), lambda i: (0, 0)),
        ),
        compiler_params=pltpu.CompilerParams(
            dimension_semantics=("arbitrary",),        # stats carried across tiles
            vmem_limit_bytes=32 * 1024 * 1024),
        cost_estimate=pl.CostEstimate(
            flops=2 * m_pad * K * Cout,
            transcendentals=0,
            bytes_accessed=(K * m_pad * 2 + Cout * K * 2
                            + Cout * m_pad * 4 + 2 * Cout * 4)),
    )(w_t, x_t)

    # ---- pass 2: normalize + LeakyReLU (fully parallel over M tiles) ----
    out_t = pl.pallas_call(
        _bn_lrelu_kernel,
        out_shape=jax.ShapeDtypeStruct((Cout, m_pad), jnp.float32),
        grid=(nm,),
        in_specs=[
            pl.BlockSpec((Cout, tm), lambda i: (0, i)),
            pl.BlockSpec((Cout, 1), lambda i: (0, 0)),
            pl.BlockSpec((Cout, 1), lambda i: (0, 0)),
        ],
        out_specs=pl.BlockSpec((Cout, tm), lambda i: (0, i)),
        compiler_params=pltpu.CompilerParams(
            dimension_semantics=("parallel",),         # shards across TCs on v7x
            vmem_limit_bytes=32 * 1024 * 1024),
        cost_estimate=pl.CostEstimate(
            flops=4 * m_pad * Cout,
            transcendentals=0,
            bytes_accessed=2 * Cout * m_pad * 4 + 2 * Cout * 4),
    )(conv_t, mean, invstd)

    # glue: (Cout, M) -> (Cout, N, Ho, Wo) -> NCHW
    out = out_t[:, :M].reshape(Cout, N, Ho, Wo)
    return jnp.transpose(out, (1, 0, 2, 3))


def _reference(x_nchw, weight_oihw, bias, dilation):
    """Pure-JAX f32 reference of the PyTorch forward (training-mode BatchNorm)."""
    y = jax.lax.conv_general_dilated(
        x_nchw, weight_oihw, window_strides=(1, 1), padding=((1, 1), (1, 1)),
        rhs_dilation=(dilation, dilation),
        dimension_numbers=("NCHW", "OIHW", "NCHW"),
        precision=jax.lax.Precision.HIGHEST)
    y = y + bias[None, :, None, None]
    mean = jnp.mean(y, axis=(0, 2, 3), keepdims=True)
    var = jnp.mean((y - mean) ** 2, axis=(0, 2, 3), keepdims=True)
    yn = (y - mean) * jax.lax.rsqrt(var + BN_EPS)
    return jnp.where(yn >= 0, yn, NEG_SLOPE * yn)


if __name__ == "__main__":
    key = jax.random.PRNGKey(0)

    # Small single-tile case (matches the module defaults) + a multi-tile case
    # that exercises the grid / stats accumulation / zero-padding path.
    for (N, Cin, Cout, H, W, dil) in [(2, 4, 8, 16, 16, 1), (2, 4, 8, 40, 40, 2)]:
        kx, kw, kb = jax.random.split(jax.random.fold_in(key, H + dil), 3)
        x = jax.random.normal(kx, (N, Cin, H, W), dtype=jnp.float32)
        weight = jax.random.normal(kw, (Cout, Cin, KH, KW), dtype=jnp.float32) * 0.1
        bias = jax.random.normal(kb, (Cout,), dtype=jnp.float32) * 0.1

        out = jax.block_until_ready(dilated_conv_block(x, weight, bias, dilation=dil))
        ref = jax.block_until_ready(_reference(x, weight, bias, dil))
        assert out.shape == ref.shape, (out.shape, ref.shape)
        max_err = float(jnp.max(jnp.abs(out - ref)))
        # bf16 matmul operands (f32 accumulation) vs a full-f32 reference.
        assert max_err < 2e-2, max_err

    print("KERNEL_OK")
</pallas_src>

<mosaic_0001>
module attributes {stable_mosaic.version = 11 : i64} {
  func.func @_conv_stats_kernel(%arg0: i32, %arg1: memref<8x64xbf16, #tpu.memory_space<vmem>>, %arg2: memref<64x456xbf16, #tpu.memory_space<vmem>>, %arg3: memref<8x456xf32, #tpu.memory_space<vmem>>, %arg4: memref<8x1xf32, #tpu.memory_space<vmem>>, %arg5: memref<8x1xf32, #tpu.memory_space<vmem>>) attributes {dimension_semantics = [#tpu.dimension_semantics<arbitrary>], iteration_bounds = array<i64: 1>, scalar_prefetch = 0 : i64, scratch_operands = 0 : i64, tpu.core_type = #tpu.core_type<tc>, window_params = [{pipeline_mode = #tpu.pipeline_mode<synchronous>, transform_indices = @transform_0, window_bounds = array<i64: 8, 64>}, {transform_indices = @transform_1, window_bounds = array<i64: 64, 456>}, {transform_indices = @transform_2, window_bounds = array<i64: 8, 456>}, {pipeline_mode = #tpu.pipeline_mode<synchronous>, transform_indices = @transform_3, window_bounds = array<i64: 8, 1>}, {pipeline_mode = #tpu.pipeline_mode<synchronous>, transform_indices = @transform_4, window_bounds = array<i64: 8, 1>}]} {
    %c0_i32 = arith.constant 0 : i32
    %0 = arith.cmpi eq, %arg0, %c0_i32 : i32
    %1 = arith.extui %0 : i1 to i32
    %c0_i32_0 = arith.constant 0 : i32
    %2 = arith.cmpi ne, %1, %c0_i32_0 : i32
    scf.if %2 {
      %cst_18 = arith.constant 0.000000e+00 : f32
      %21 = vector.broadcast %cst_18 : f32 to vector<8x1xf32>
      %c0_19 = arith.constant 0 : index
      %c0_20 = arith.constant 0 : index
      %22 = vector.load %arg4[%c0_19, %c0_20] : memref<8x1xf32, #tpu.memory_space<vmem>>, vector<8x1xf32>
      tpu.vector_store %arg4[%c0_19, %c0_20], %21 {strides = array<i32>} : memref<8x1xf32, #tpu.memory_space<vmem>>, vector<8x1xf32>,
      %cst_21 = arith.constant 0.000000e+00 : f32
      %23 = vector.broadcast %cst_21 : f32 to vector<8x1xf32>
      %c0_22 = arith.constant 0 : index
      %c0_23 = arith.constant 0 : index
      %24 = vector.load %arg5[%c0_22, %c0_23] : memref<8x1xf32, #tpu.memory_space<vmem>>, vector<8x1xf32>
      tpu.vector_store %arg5[%c0_22, %c0_23], %23 {strides = array<i32>} : memref<8x1xf32, #tpu.memory_space<vmem>>, vector<8x1xf32>,
    } else {
    }
    %c0 = arith.constant 0 : index
    %c0_1 = arith.constant 0 : index
    %3 = vector.load %arg1[%c0, %c0_1] : memref<8x64xbf16, #tpu.memory_space<vmem>>, vector<8x64xbf16>
    %c0_2 = arith.constant 0 : index
    %c0_3 = arith.constant 0 : index
    %4 = vector.load %arg2[%c0_2, %c0_3] : memref<64x456xbf16, #tpu.memory_space<vmem>>, vector<64x456xbf16>
    %cst = arith.constant dense<0.000000e+00> : vector<8x456xf32>
    %5 = tpu.matmul %3, %4, %cst {dimension_numbers = #tpu.dot_dimension_numbers<[1], [0], [0], [1], [0, 0, 1, 1], [], []>} : vector<8x64xbf16>, vector<64x456xbf16>, vector<8x456xf32> -> vector<8x456xf32>
    %c0_4 = arith.constant 0 : index
    %c0_5 = arith.constant 0 : index
    %6 = vector.load %arg3[%c0_4, %c0_5] : memref<8x456xf32, #tpu.memory_space<vmem>>, vector<8x456xf32>
    tpu.vector_store %arg3[%c0_4, %c0_5], %5 {strides = array<i32>} : memref<8x456xf32, #tpu.memory_space<vmem>>, vector<8x456xf32>,
    %c0_6 = arith.constant 0 : index
    %c0_7 = arith.constant 0 : index
    %7 = vector.load %arg4[%c0_6, %c0_7] : memref<8x1xf32, #tpu.memory_space<vmem>>, vector<8x1xf32>
    %cst_8 = arith.constant dense<0.000000e+00> : vector<8xf32>
    %8 = vector.multi_reduction <add>, %5, %cst_8 [1] : vector<8x456xf32> to vector<8xf32>
    %9 = vector.shape_cast %8 : vector<8xf32> to vector<8x1xf32>
    %10 = arith.addf %7, %9 : vector<8x1xf32>
    %c0_9 = arith.constant 0 : index
    %c0_10 = arith.constant 0 : index
    %11 = vector.load %arg4[%c0_9, %c0_10] : memref<8x1xf32, #tpu.memory_space<vmem>>, vector<8x1xf32>
    tpu.vector_store %arg4[%c0_9, %c0_10], %10 {strides = array<i32>} : memref<8x1xf32, #tpu.memory_space<vmem>>, vector<8x1xf32>,
    %c0_11 = arith.constant 0 : index
    %c0_12 = arith.constant 0 : index
    %12 = vector.load %arg5[%c0_11, %c0_12] : memref<8x1xf32, #tpu.memory_space<vmem>>, vector<8x1xf32>
    %13 = arith.mulf %5, %5 : vector<8x456xf32>
    %cst_13 = arith.constant dense<0.000000e+00> : vector<8xf32>
    %14 = vector.multi_reduction <add>, %13, %cst_13 [1] : vector<8x456xf32> to vector<8xf32>
    %15 = vector.shape_cast %14 : vector<8xf32> to vector<8x1xf32>
    %16 = arith.addf %12, %15 : vector<8x1xf32>
    %c0_14 = arith.constant 0 : index
    %c0_15 = arith.constant 0 : index
    %17 = vector.load %arg5[%c0_14, %c0_15] : memref<8x1xf32, #tpu.memory_space<vmem>>, vector<8x1xf32>
    tpu.vector_store %arg5[%c0_14, %c0_15], %16 {strides = array<i32>} : memref<8x1xf32, #tpu.memory_space<vmem>>, vector<8x1xf32>,
    %c0_i32_16 = arith.constant 0 : i32
    %18 = arith.cmpi eq, %arg0, %c0_i32_16 : i32
    %19 = arith.extui %18 : i1 to i32
    %c0_i32_17 = arith.constant 0 : i32
    %20 = arith.cmpi ne, %19, %c0_i32_17 : i32
    scf.if %20 {
      %c0_18 = arith.constant 0 : index
      %c0_19 = arith.constant 0 : index
      %21 = vector.load %arg4[%c0_18, %c0_19] : memref<8x1xf32, #tpu.memory_space<vmem>>, vector<8x1xf32>
      %cst_20 = arith.constant 0.00222222228 : f32
      %22 = vector.broadcast %cst_20 : f32 to vector<8x1xf32>
      %23 = arith.mulf %21, %22 : vector<8x1xf32>
      %c0_21 = arith.constant 0 : index
      %c0_22 = arith.constant 0 : index
      %24 = vector.load %arg5[%c0_21, %c0_22] : memref<8x1xf32, #tpu.memory_space<vmem>>, vector<8x1xf32>
      %cst_23 = arith.constant 0.00222222228 : f32
      %25 = vector.broadcast %cst_23 : f32 to vector<8x1xf32>
      %26 = arith.mulf %24, %25 : vector<8x1xf32>
      %27 = arith.mulf %23, %23 : vector<8x1xf32>
      %28 = arith.subf %26, %27 : vector<8x1xf32>
      %cst_24 = arith.constant 0.000000e+00 : f32
      %29 = vector.broadcast %cst_24 : f32 to vector<8x1xf32>
      %30 = arith.maximumf %28, %29 : vector<8x1xf32>
      %c0_25 = arith.constant 0 : index
      %c0_26 = arith.constant 0 : index
      %31 = vector.load %arg4[%c0_25, %c0_26] : memref<8x1xf32, #tpu.memory_space<vmem>>, vector<8x1xf32>
      tpu.vector_store %arg4[%c0_25, %c0_26], %23 {strides = array<i32>} : memref<8x1xf32, #tpu.memory_space<vmem>>, vector<8x1xf32>,
      %cst_27 = arith.constant 9.99999974E-6 : f32
      %32 = vector.broadcast %cst_27 : f32 to vector<8x1xf32>
      %33 = arith.addf %30, %32 : vector<8x1xf32>
      %34 = math.rsqrt %33 : vector<8x1xf32>
      %c0_28 = arith.constant 0 : index
      %c0_29 = arith.constant 0 : index
      %35 = vector.load %arg5[%c0_28, %c0_29] : memref<8x1xf32, #tpu.memory_space<vmem>>, vector<8x1xf32>
      tpu.vector_store %arg5[%c0_28, %c0_29], %34 {strides = array<i32>} : memref<8x1xf32, #tpu.memory_space<vmem>>, vector<8x1xf32>,
    } else {
    }
    return
  }
  func.func @transform_0(%arg0: i32) -> (i32, i32) {
    %c0_i32 = arith.constant 0 : i32
    %c0_i32_0 = arith.constant 0 : i32
    %c0_i32_1 = arith.constant 0 : i32
    return %c0_i32, %c0_i32_0 : i32, i32
  }
  func.func @transform_1(%arg0: i32) -> (i32, i32) {
    %c0_i32 = arith.constant 0 : i32
    %c0_i32_0 = arith.constant 0 : i32
    return %c0_i32, %arg0 : i32, i32
  }
  func.func @transform_2(%arg0: i32) -> (i32, i32) {
    %c0_i32 = arith.constant 0 : i32
    %c0_i32_0 = arith.constant 0 : i32
    return %c0_i32, %arg0 : i32, i32
  }
  func.func @transform_3(%arg0: i32) -> (i32, i32) {
    %c0_i32 = arith.constant 0 : i32
    %c0_i32_0 = arith.constant 0 : i32
    %c0_i32_1 = arith.constant 0 : i32
    return %c0_i32, %c0_i32_0 : i32, i32
  }
  func.func @transform_4(%arg0: i32) -> (i32, i32) {
    %c0_i32 = arith.constant 0 : i32
    %c0_i32_0 = arith.constant 0 : i32
    %c0_i32_1 = arith.constant 0 : i32
    return %c0_i32, %c0_i32_0 : i32, i32
  }
}

module attributes {stable_mosaic.version = 11 : i64} {
  func.func @_bn_lrelu_kernel(%arg0: i32, %arg1: memref<8x456xf32, #tpu.memory_space<vmem>>, %arg2: memref<8x1xf32, #tpu.memory_space<vmem>>, %arg3: memref<8x1xf32, #tpu.memory_space<vmem>>, %arg4: memref<8x456xf32, #tpu.memory_space<vmem>>) attributes {dimension_semantics = [#tpu.dimension_semantics<parallel>], iteration_bounds = array<i64: 1>, scalar_prefetch = 0 : i64, scratch_operands = 0 : i64, tpu.core_type = #tpu.core_type<tc>, window_params = [{transform_indices = @transform_0, window_bounds = array<i64: 8, 456>}, {pipeline_mode = #tpu.pipeline_mode<synchronous>, transform_indices = @transform_1, window_bounds = array<i64: 8, 1>}, {pipeline_mode = #tpu.pipeline_mode<synchronous>, transform_indices = @transform_2, window_bounds = array<i64: 8, 1>}, {transform_indices = @transform_3, window_bounds = array<i64: 8, 456>}]} {
    %c0 = arith.constant 0 : index
    %c0_0 = arith.constant 0 : index
    %0 = vector.load %arg1[%c0, %c0_0] : memref<8x456xf32, #tpu.memory_space<vmem>>, vector<8x456xf32>
    %c0_1 = arith.constant 0 : index
    %c0_2 = arith.constant 0 : index
    %1 = vector.load %arg2[%c0_1, %c0_2] : memref<8x1xf32, #tpu.memory_space<vmem>>, vector<8x1xf32>
    %2 = vector.broadcast %1 : vector<8x1xf32> to vector<8x456xf32>
    %3 = arith.subf %0, %2 : vector<8x456xf32>
    %c0_3 = arith.constant 0 : index
    %c0_4 = arith.constant 0 : index
    %4 = vector.load %arg3[%c0_3, %c0_4] : memref<8x1xf32, #tpu.memory_space<vmem>>, vector<8x1xf32>
    %5 = vector.broadcast %4 : vector<8x1xf32> to vector<8x456xf32>
    %6 = arith.mulf %3, %5 : vector<8x456xf32>
    %cst = arith.constant 0.000000e+00 : f32
    %7 = vector.broadcast %cst : f32 to vector<8x456xf32>
    %8 = arith.cmpf oge, %6, %7 : vector<8x456xf32>
    %cst_5 = arith.constant 2.000000e-01 : f32
    %9 = vector.broadcast %cst_5 : f32 to vector<8x456xf32>
    %10 = arith.mulf %9, %6 : vector<8x456xf32>
    %11 = arith.select %8, %6, %10 : vector<8x456xi1>, vector<8x456xf32>
    %c0_6 = arith.constant 0 : index
    %c0_7 = arith.constant 0 : index
    %12 = vector.load %arg4[%c0_6, %c0_7] : memref<8x456xf32, #tpu.memory_space<vmem>>, vector<8x456xf32>
    tpu.vector_store %arg4[%c0_6, %c0_7], %11 {strides = array<i32>} : memref<8x456xf32, #tpu.memory_space<vmem>>, vector<8x456xf32>,
    return
  }
  func.func @transform_0(%arg0: i32) -> (i32, i32) {
    %c0_i32 = arith.constant 0 : i32
    %c0_i32_0 = arith.constant 0 : i32
    return %c0_i32, %arg0 : i32, i32
  }
  func.func @transform_1(%arg0: i32) -> (i32, i32) {
    %c0_i32 = arith.constant 0 : i32
    %c0_i32_0 = arith.constant 0 : i32
    %c0_i32_1 = arith.constant 0 : i32
    return %c0_i32, %c0_i32_0 : i32, i32
  }
  func.func @transform_2(%arg0: i32) -> (i32, i32) {
    %c0_i32 = arith.constant 0 : i32
    %c0_i32_0 = arith.constant 0 : i32
    %c0_i32_1 = arith.constant 0 : i32
    return %c0_i32, %c0_i32_0 : i32, i32
  }
  func.func @transform_3(%arg0: i32) -> (i32, i32) {
    %c0_i32 = arith.constant 0 : i32
    %c0_i32_0 = arith.constant 0 : i32
    return %c0_i32, %arg0 : i32, i32
  }
}

</mosaic_0001>

<llo_original>
// kernel: dilated_conv_block.3
$region0: #{dilated_conv_block.3}
  #allocation0 [shape = 'u32[]', space=smem, size = 0x4, offset = 0x4, fixed_abs, tag = 'smem constant byte address 0x4 - core index']
  #allocation1 [shape = 'u32[144,128]{1,0:T(1,128)}', space=vmem, size = 0x12000, scoped, tag = 'internal scratch']
  %s0 = inlined_call_operand.vmem [shape: f32[8,456], index: 0, kind: input, shape index: {}]
  %s1 = inlined_call_operand.vmem [shape: f32[8,1], index: 1, kind: input, shape index: {}]
  %s2 = inlined_call_operand.vmem [shape: f32[8,1], index: 2, kind: input, shape index: {}]
  %s3 = inlined_call_operand.vmem [shape: f32[8,456], index: 3, kind: output, shape index: {}]
  %s4 = sld [smem:[#allocation0]]
  $region22: #{dilated_conv_block.3} parent=0
    _
  %s6 = ssub.s32 1, %s4
  %s7 = scalar_select 0, %s6, %s4
  // Predicated region
  $region2: #{dilated_conv_block.3} parent=0 // pred_check
    _
  $region3: #{dilated_conv_block.3} parent=0 // pred_check_branch
    %9 = sbr.rel (0) target = $region5
  $region4: #{dilated_conv_block.3} parent=0 // pred_region
    _
  $region5: #{dilated_conv_block.3} parent=0 // pred_fallthru
    _
  // Predicated region
  $region6: #{dilated_conv_block.3} parent=0 // pred_check
    _
  $region7: #{dilated_conv_block.3} parent=0 // pred_check_branch
    %11 = sbr.rel (0) target = $region9
  $region8: #{dilated_conv_block.3} parent=0 // pred_region
    _
  $region9: #{dilated_conv_block.3} parent=0 // pred_fallthru
    _
  // Predicated region
  $region10: #{dilated_conv_block.3} parent=0 // pred_check
    _
  $region11: #{dilated_conv_block.3} parent=0 // pred_check_branch
    %13 = sbr.rel (0) target = $region13
  $region12: #{dilated_conv_block.3} parent=0 // pred_region
    _
  $region13: #{dilated_conv_block.3} parent=0 // pred_fallthru
    _
  %v14 = vld [vmem:[%s0] sm:$0xff]
  %v15 = vld [vmem:[%s0 + $0x8] sm:$0xff]
  %v16 = vld [vmem:[%s0 + $0x10] sm:$0xff]
  %v17 = vld [vmem:[%s0 + $0x18] sm:$0xff]
  %v18 = vld [vmem:[%s1] sm:$0xff]
  %20 = vset.pattern.permute.xlu0 0
  %21 = vperm.xlu0 %20, %v18
  %v22 = vpop.permute.xlu0 %21
  %v24 = vsub.f32 %v14, %v22
  %v25 = vsub.f32 %v15, %v22
  %v26 = vsub.f32 %v16, %v22
  %v27 = vsub.f32 %v17, %v22
  %v28 = vld [vmem:[%s2] sm:$0xff]
  %30 = vset.pattern.permute.xlu0 0
  %31 = vperm.xlu0 %30, %v28
  %v32 = vpop.permute.xlu0 %31
  %v34 = vmul.f32 %v24, %v32
  %v35 = vmul.f32 %v25, %v32
  %v36 = vmul.f32 %v26, %v32
  %v37 = vmul.f32 %v27, %v32
  %vm38 = vcmp.ge.f32.partialorder %v34, 0.0
  %vm39 = vcmp.ge.f32.partialorder %v35, 0.0
  %vm40 = vcmp.ge.f32.partialorder %v36, 0.0
  %vm41 = vcmp.ge.f32.partialorder %v37, 0.0
  %v42 = vmul.f32 %v34, 0.2
  %v43 = vmul.f32 %v35, 0.2
  %v44 = vmul.f32 %v36, 0.2
  %v45 = vmul.f32 %v37, 0.2
  %v46 = vsel %vm38, %v34, %v42
  %v47 = vsel %vm39, %v35, %v43
  %v48 = vsel %vm40, %v36, %v44
  %v49 = vsel %vm41, %v37, %v45
  %50 = vst [vmem:[%s3] sm:$0xff] %v46
  %51 = vst [vmem:[%s3 + $0x8] sm:$0xff] %v47
  %52 = vst [vmem:[%s3 + $0x10] sm:$0xff] %v48
  %vm53 = vcmask 588800
  %54 = vst.msk [vmem:[%s3 + $0x18] sm:$0xff] %vm53, %v49
  // Predicated region
  $region14: #{dilated_conv_block.3} parent=0 // pred_check
    _
  $region15: #{dilated_conv_block.3} parent=0 // pred_check_branch
    %56 = sbr.rel (0) target = $region17
  $region16: #{dilated_conv_block.3} parent=0 // pred_region
    _
  $region17: #{dilated_conv_block.3} parent=0 // pred_fallthru
    _
  // Predicated region
  $region18: #{dilated_conv_block.3} parent=0 // pred_check
    _
  $region19: #{dilated_conv_block.3} parent=0 // pred_check_branch
    %58 = sbr.rel (0) target = $region21
  $region20: #{dilated_conv_block.3} parent=0 // pred_region
    _
  $region21: #{dilated_conv_block.3} parent=0 // pred_fallthru
    _

// kernel: dilated_conv_block.2
$region0: #{dilated_conv_block.2}
  #allocation0 [shape = 'u32[]', space=smem, size = 0x4, offset = 0x4, fixed_abs, tag = 'smem constant byte address 0x4 - core index']
  #allocation1 [shape = 'u32[144,128]{1,0:T(1,128)}', space=vmem, size = 0x12000, scoped, tag = 'internal scratch']
  %s0 = inlined_call_operand.vmem [shape: bf16[8,64], index: 0, kind: input, shape index: {}]
  %s1 = inlined_call_operand.vmem [shape: bf16[64,456], index: 1, kind: input, shape index: {}]
  %s2 = inlined_call_operand.vmem [shape: f32[8,456], index: 2, kind: output, shape index: {0}]
  %s3 = inlined_call_operand.vmem [shape: f32[8,1], index: 3, kind: output, shape index: {1}]
  %s4 = inlined_call_operand.vmem [shape: f32[8,1], index: 4, kind: output, shape index: {2}]
  %5 = xla_tuple %s2, %s3, %s4
  %s6 = sld [smem:[#allocation0]]
  $region42: #{dilated_conv_block.2} parent=0
    _
  %s8 = ssub.s32 1, %s6
  %s9 = scalar_select 0, %s8, %s6
  // Predicated region
  $region2: #{dilated_conv_block.2} parent=0 // pred_check
    _
  $region3: #{dilated_conv_block.2} parent=0 // pred_check_branch
    %11 = sbr.rel (0) target = $region5
  $region4: #{dilated_conv_block.2} parent=0 // pred_region
    _
  $region5: #{dilated_conv_block.2} parent=0 // pred_fallthru
    _
  // Predicated region
  $region6: #{dilated_conv_block.2} parent=0 // pred_check
    _
  $region7: #{dilated_conv_block.2} parent=0 // pred_check_branch
    %13 = sbr.rel (0) target = $region9
  $region8: #{dilated_conv_block.2} parent=0 // pred_region
    _
  $region9: #{dilated_conv_block.2} parent=0 // pred_fallthru
    _
  %p15 = scmp.eq.s32.totalorder 0, 0
  // Predicated region
  $region10: #{dilated_conv_block.2} parent=0 // pred_check
    %p16 = pneg %p15
  $region11: #{dilated_conv_block.2} parent=0 // pred_check_branch
    %18 = sbr.rel (%p16) target = $region13
  $region12: #{dilated_conv_block.2} parent=0 // pred_region
    %vm19 = vcmask 7168
    %20 = vst.msk [vmem:[%s3] sm:$0xff] %vm19, 0.0
    %21 = vst.msk [vmem:[%s4] sm:$0xff] %vm19, 0.0
  $region13: #{dilated_conv_block.2} parent=0 // pred_fallthru
    _
  %v22 = vld [vmem:[%s0] sm:$0xf]
  %v23 = vld [vmem:[%s1] sm:$0xff]
  %v24 = vld [vmem:[%s1 + $0x8] sm:$0xff]
  %v25 = vld [vmem:[%s1 + $0x10] sm:$0xff]
  %v26 = vld [vmem:[%s1 + $0x18] sm:$0xff]
  %v27 = vld [vmem:[%s1 + $0x20] sm:$0xff]
  %v28 = vld [vmem:[%s1 + $0x28] sm:$0xff]
  %v29 = vld [vmem:[%s1 + $0x30] sm:$0xff]
  %v30 = vld [vmem:[%s1 + $0x38] sm:$0xff]
  %v31 = vld [vmem:[%s1 + $0x40] sm:$0xff]
  %v32 = vld [vmem:[%s1 + $0x48] sm:$0xff]
  %v33 = vld [vmem:[%s1 + $0x50] sm:$0xff]
  %v34 = vld [vmem:[%s1 + $0x58] sm:$0xff]
  %v35 = vld [vmem:[%s1 + $0x60] sm:$0xff]
  %v36 = vld [vmem:[%s1 + $0x68] sm:$0xff]
  %v37 = vld [vmem:[%s1 + $0x70] sm:$0xff]
  %v38 = vld [vmem:[%s1 + $0x78] sm:$0xff]
  %v55 = vunpack.c.l.b16 %v23
  %v56 = vunpack.c.h.b16 %v23
  %v57 = vunpack.c.l.b16 %v24
  %v58 = vunpack.c.h.b16 %v24
  %v59 = vunpack.c.l.b16 %v25
  %v60 = vunpack.c.h.b16 %v25
  %v61 = vunpack.c.l.b16 %v26
  %v62 = vunpack.c.h.b16 %v26
  %v63 = vunpack.c.l.b16 %v27
  %v64 = vunpack.c.h.b16 %v27
  %v65 = vunpack.c.l.b16 %v28
  %v66 = vunpack.c.h.b16 %v28
  %v67 = vunpack.c.l.b16 %v29
  %v68 = vunpack.c.h.b16 %v29
  %v69 = vunpack.c.l.b16 %v30
  %v70 = vunpack.c.h.b16 %v30
  %v71 = vunpack.c.l.b16 %v31
  %v72 = vunpack.c.h.b16 %v31
  %v73 = vunpack.c.l.b16 %v32
  %v74 = vunpack.c.h.b16 %v32
  %v75 = vunpack.c.l.b16 %v33
  %v76 = vunpack.c.h.b16 %v33
  %v77 = vunpack.c.l.b16 %v34
  %v78 = vunpack.c.h.b16 %v34
  %v79 = vunpack.c.l.b16 %v35
  %v80 = vunpack.c.h.b16 %v35
  %v81 = vunpack.c.l.b16 %v36
  %v82 = vunpack.c.h.b16 %v36
  %v83 = vunpack.c.l.b16 %v37
  %v84 = vunpack.c.h.b16 %v37
  %v85 = vunpack.c.l.b16 %v38
  %v86 = vunpack.c.h.b16 %v38
  %v87 = vpack.c.b16 %v59, %v55
  %v88 = vpack.c.b16 %v60, %v56
  %v89 = vpack.c.b16 %v61, %v57
  %v90 = vpack.c.b16 %v62, %v58
  %v91 = vpack.c.b16 %v67, %v63
  %v92 = vpack.c.b16 %v68, %v64
  %v93 = vpack.c.b16 %v69, %v65
  %v94 = vpack.c.b16 %v70, %v66
  %v95 = vpack.c.b16 %v75, %v71
  %v96 = vpack.c.b16 %v76, %v72
  %v97 = vpack.c.b16 %v77, %v73
  %v98 = vpack.c.b16 %v78, %v74
  %v99 = vpack.c.b16 %v83, %v79
  %v100 = vpack.c.b16 %v84, %v80
  %v101 = vpack.c.b16 %v85, %v81
  %v102 = vpack.c.b16 %v86, %v82
  %vm119 = vcmask 523264
  %v121 = vsel %vm119, %v22, 0
  %123 = vmatprep.subr.bf16.mxu0 %v88
  %124 = vmatpush1.bf16.msra.mxu0 %v87
  %125 = vmatprep.subr.bf16.mxu0 %v92
  %126 = vmatpush1.bf16.msra.mxu0 %v91
  %127 = vmatprep.subr.bf16.mxu0 %v96
  %128 = vmatpush1.bf16.msra.mxu0 %v95
  %129 = vmatprep.subr.bf16.mxu0 %v100
  %130 = vmatpush1.bf16.msra.mxu0 %v99
  %131 = vmatprep.subr.bf16.mxu0 0
  %132 = vmatpush1.bf16.msra.mxu0 0
  %133 = vmatprep.subr.bf16.mxu0 0
  %134 = vmatpush1.bf16.msra.mxu0 0
  %135 = vmatprep.subr.bf16.mxu0 0
  %136 = vmatpush1.bf16.msra.mxu0 0
  %137 = vmatprep.subr.bf16.mxu0 0
  %138 = vmatpush1.bf16.msra.mxu0 0
  %139 = vmatprep.subr.bf16.mxu0 0
  %140 = vmatpush1.bf16.msra.mxu0 0
  %141 = vmatprep.subr.bf16.mxu0 0
  %142 = vmatpush1.bf16.msra.mxu0 0
  %143 = vmatprep.subr.bf16.mxu0 0
  %144 = vmatpush1.bf16.msra.mxu0 0
  %145 = vmatprep.subr.bf16.mxu0 0
  %146 = vmatpush1.bf16.msra.mxu0 0
  %147 = vmatprep.subr.bf16.mxu0 0
  %148 = vmatpush1.bf16.msra.mxu0 0
  %149 = vmatprep.subr.bf16.mxu0 0
  %150 = vmatpush1.bf16.msra.mxu0 0
  %151 = vmatprep.subr.bf16.mxu0 0
  %152 = vmatpush1.bf16.msra.mxu0 0
  %153 = vmatprep.subr.bf16.mxu0 0
  %154 = vmatpush1.bf16.msra.mxu0 0
  %155 = vmatprep.mubr.bf16.mxu0 0
  %156 = vmatmul.mubr.bf16.gmra.mrb[0].mxu0 %v121
  %v157 = vpop.f32.mrb[0].mxu0
  %v158 = vadd.f32 0.0, %v157
  %v159 = vpop.f32.mrb[0].mxu0
  %v160 = vadd.f32 0.0, %v159
  %v161 = vpop.f32.mrb[0].mxu0
  %v162 = vpop.f32.mrb[0].mxu0
  %163 = vdwg.mxu0
  %164 = vmatprep.subr.bf16.mxu0 %v90
  %165 = vmatpush1.bf16.msra.mxu0 %v89
  %166 = vmatprep.subr.bf16.mxu0 %v94
  %167 = vmatpush1.bf16.msra.mxu0 %v93
  %168 = vmatprep.subr.bf16.mxu0 %v98
  %169 = vmatpush1.bf16.msra.mxu0 %v97
  %170 = vmatprep.subr.bf16.mxu0 %v102
  %171 = vmatpush1.bf16.msra.mxu0 %v101
  %172 = vmatprep.subr.bf16.mxu0 0
  %173 = vmatpush1.bf16.msra.mxu0 0
  %174 = vmatprep.subr.bf16.mxu0 0
  %175 = vmatpush1.bf16.msra.mxu0 0
  %176 = vmatprep.subr.bf16.mxu0 0
  %177 = vmatpush1.bf16.msra.mxu0 0
  %178 = vmatprep.subr.bf16.mxu0 0
  %179 = vmatpush1.bf16.msra.mxu0 0
  %180 = vmatprep.subr.bf16.mxu0 0
  %181 = vmatpush1.bf16.msra.mxu0 0
  %182 = vmatprep.subr.bf16.mxu0 0
  %183 = vmatpush1.bf16.msra.mxu0 0
  %184 = vmatprep.subr.bf16.mxu0 0
  %185 = vmatpush1.bf16.msra.mxu0 0
  %186 = vmatprep.subr.bf16.mxu0 0
  %187 = vmatpush1.bf16.msra.mxu0 0
  %188 = vmatprep.subr.bf16.mxu0 0
  %189 = vmatpush1.bf16.msra.mxu0 0
  %190 = vmatprep.subr.bf16.mxu0 0
  %191 = vmatpush1.bf16.msra.mxu0 0
  %192 = vmatprep.subr.bf16.mxu0 0
  %193 = vmatpush1.bf16.msra.mxu0 0
  %194 = vmatprep.subr.bf16.mxu0 0
  %195 = vmatpush1.bf16.msra.mxu0 0
  %196 = vmatprep.mubr.bf16.mxu0 0
  %197 = vmatmul.mubr.bf16.gmra.mrb[0].mxu0 %v121
  %v198 = vpop.f32.mrb[0].mxu0
  %v199 = vadd.f32 0.0, %v198
  %v200 = vpop.f32.mrb[0].mxu0
  %v201 = vadd.f32 0.0, %v200
  %v202 = vpop.f32.mrb[0].mxu0
  %v203 = vpop.f32.mrb[0].mxu0
  %204 = vdwg.mxu0
  %205 = vst [vmem:[%s2] sm:$0xff] %v158
  %206 = vst [vmem:[%s2 + $0x8] sm:$0xff] %v160
  %207 = vst [vmem:[%s2 + $0x10] sm:$0xff] %v199
  %vm208 = vcmask 588800
  %209 = vst.msk [vmem:[%s2 + $0x18] sm:$0xff] %vm208, %v201
  %v210 = vld [vmem:[%s3] sm:$0xff]
  %v211 = vadd.f32 %v158, %v160
  %v212 = vadd.f32 %v211, %v199
  %v213 = vsel %vm208, %v201, 0.0
  %v214 = vadd.f32 %v212, %v213
  %215 = vadd.xlane.f32.xlu0 %v214
  %v216 = vpop.xlane.xlu0 %215
  %v217 = vadd.f32 %v210, %v216
  %vm218 = vcmask 7168
  %219 = vst.msk [vmem:[%s3] sm:$0xff] %vm218, %v217
  %v220 = vld [vmem:[%s4] sm:$0xff]
  %v221 = vmul.f32 %v158, %v158
  %v222 = vmul.f32 %v160, %v160
  %v223 = vmul.f32 %v199, %v199
  %v224 = vmul.f32 %v201, %v201
  %v225 = vadd.f32 %v221, %v222
  %v226 = vadd.f32 %v225, %v223
  %v227 = vsel %vm208, %v224, 0.0
  %v228 = vadd.f32 %v226, %v227
  %229 = vadd.xlane.f32.xlu0 %v228
  %v230 = vpop.xlane.xlu0 %229
  %v231 = vadd.f32 %v220, %v230
  %232 = vst.msk [vmem:[%s4] sm:$0xff] %vm218, %v231
  // Predicated region
  $region14: #{dilated_conv_block.2} parent=0 // pred_check
    %p233 = pneg %p15
  $region15: #{dilated_conv_block.2} parent=0 // pred_check_branch
    %235 = sbr.rel (%p233) target = $region17
  $region16: #{dilated_conv_block.2} parent=0 // pred_region
    %v236 = vld [vmem:[%s3] sm:$0xff]
    %v237 = vmul.f32 %v236, 0.0022222223
    %v238 = vld [vmem:[%s4] sm:$0xff]
    %v239 = vmul.f32 %v238, 0.0022222223
    %v240 = vmul.f32 %v237, %v237
    %v241 = vsub.f32 %v239, %v240
    %v242 = vmax.f32 %v241, 0.0
    %243 = vst.msk [vmem:[%s3] sm:$0xff] %vm218, %v237
    %v244 = vadd.f32 %v242, 1e-05
    %v245 = vrsqrt.pop %v244
    %246 = vst.msk [vmem:[%s4] sm:$0xff] %vm218, %v245
  $region17: #{dilated_conv_block.2} parent=0 // pred_fallthru
    _
  // Predicated region
  $region18: #{dilated_conv_block.2} parent=0 // pred_check
    _
  $region19: #{dilated_conv_block.2} parent=0 // pred_check_branch
    %248 = sbr.rel (0) target = $region21
  $region20: #{dilated_conv_block.2} parent=0 // pred_region
    _
  $region21: #{dilated_conv_block.2} parent=0 // pred_fallthru
    _
  // Predicated region
  $region22: #{dilated_conv_block.2} parent=0 // pred_check
    _
  $region23: #{dilated_conv_block.2} parent=0 // pred_check_branch
    %250 = sbr.rel (0) target = $region25
  $region24: #{dilated_conv_block.2} parent=0 // pred_region
    _
  $region25: #{dilated_conv_block.2} parent=0 // pred_fallthru
    _
  // Predicated region
  $region26: #{dilated_conv_block.2} parent=0 // pred_check
    _
  $region27: #{dilated_conv_block.2} parent=0 // pred_check_branch
    %252 = sbr.rel (0) target = $region29
  $region28: #{dilated_conv_block.2} parent=0 // pred_region
    _
  $region29: #{dilated_conv_block.2} parent=0 // pred_fallthru
    _
  // Predicated region
  $region30: #{dilated_conv_block.2} parent=0 // pred_check
    _
  $region31: #{dilated_conv_block.2} parent=0 // pred_check_branch
    %254 = sbr.rel (0) target = $region33
  $region32: #{dilated_conv_block.2} parent=0 // pred_region
    _
  $region33: #{dilated_conv_block.2} parent=0 // pred_fallthru
    _
  // Predicated region
  $region34: #{dilated_conv_block.2} parent=0 // pred_check
    _
  $region35: #{dilated_conv_block.2} parent=0 // pred_check_branch
    %256 = sbr.rel (0) target = $region37
  $region36: #{dilated_conv_block.2} parent=0 // pred_region
    _
  $region37: #{dilated_conv_block.2} parent=0 // pred_fallthru
    _
  // Predicated region
  $region38: #{dilated_conv_block.2} parent=0 // pred_check
    _
  $region39: #{dilated_conv_block.2} parent=0 // pred_check_branch
    %258 = sbr.rel (0) target = $region41
  $region40: #{dilated_conv_block.2} parent=0 // pred_region
    _
  $region41: #{dilated_conv_block.2} parent=0 // pred_fallthru
    _

</llo_original>
